<compile_context>
chip_gen: v7x
topology: tpu7x:2x2x1
jax: 0.10.0
libtpu: 0.0.40
codegen_flags: <defaults>
</compile_context>

<pallas_src>
import functools
import math

import jax
import jax.numpy as jnp
from jax.experimental import pallas as pl
from jax.experimental.pallas import tpu as pltpu


# ------------------------- per-generation tuning ---------------------------


def _tpu_generation():
    try:
        kind = jax.devices()[0].device_kind.lower()
    except Exception:
        return "unknown"
    if "v5" in kind:
        return "v5"
    if "v6" in kind:
        return "v6"
    if "v7" in kind or "7x" in kind:
        return "v7"
    return "unknown"


_GEN = _tpu_generation()
if _GEN in ("v5", "v6"):
    # 128 MiB physical VMEM: bigger scoped limit + bigger row tiles amortize the
    # ~0.35 us per-grid-step overhead on the mem-bound kernels.
    _VMEM_LIMIT = 64 * 1024 * 1024
    _TM_MM = 512          # row tile for weight-resident matmul kernels
    _TV_HEAD = 2048       # lm_head vocab tile
else:
    # v7x (64 MiB physical VMEM) or unknown: stay conservative.
    _VMEM_LIMIT = 32 * 1024 * 1024
    _TM_MM = 256
    _TV_HEAD = 1024
# kv/q tile: 256 fills the 256-wide MXU on v6e/v7x; keep 128 on v5e.
_T_ATTN = 128 if _GEN == "v5" else 256

# Flip to jnp.bfloat16 to halve the (M, vocab) logits writeback (the largest
# single HBM transfer in the forward) when downstream numerics allow.
_LOGITS_DTYPE = jnp.float32


def _cparams(sem):
    return pltpu.CompilerParams(dimension_semantics=sem,
                                vmem_limit_bytes=_VMEM_LIMIT)


def _row_tile(dim, pref):
    """Largest divisor of `dim` that is <= pref (preferring multiples of 8).

    Avoids the old 'fall back to the full dimension' footgun which could blow
    the VMEM budget for non-divisible M.
    """
    if dim <= pref:
        return dim
    best = None
    for t in range(pref, 0, -1):
        if dim % t == 0:
            if t % 8 == 0:
                return t
            if best is None:
                best = t
    return best if best is not None else dim


# ----------------------------- Pallas kernels ------------------------------


def _ln_linear_kernel(x_ref, g_ref, b_ref, w_ref, bias_ref, o_ref):
    # LayerNorm fused into the matmul prologue (f32 stats, bf16 MXU inputs).
    x = x_ref[...].astype(jnp.float32)
    mean = jnp.mean(x, axis=-1, keepdims=True)
    var = jnp.mean(jnp.square(x - mean), axis=-1, keepdims=True)
    xn = (x - mean) * jax.lax.rsqrt(var + 1e-5)
    xn = (xn * g_ref[...] + b_ref[...]).astype(w_ref.dtype)
    acc = jnp.dot(xn, w_ref[...], preferred_element_type=jnp.float32)
    o_ref[...] = (acc + bias_ref[...]).astype(o_ref.dtype)


def ln_linear(x2d, g, b, w, bias, *, tm_pref=None):
    M, C = x2d.shape
    N = w.shape[1]
    tm = _row_tile(M, tm_pref or _TM_MM)
    return pl.pallas_call(
        _ln_linear_kernel,
        out_shape=jax.ShapeDtypeStruct((M, N), x2d.dtype),
        grid=(M // tm,),
        in_specs=[pl.BlockSpec((tm, C), lambda i: (i, 0)),
                  pl.BlockSpec((1, C), lambda i: (0, 0)),
                  pl.BlockSpec((1, C), lambda i: (0, 0)),
                  pl.BlockSpec((C, N), lambda i: (0, 0)),   # weight resident
                  pl.BlockSpec((1, N), lambda i: (0, 0))],
        out_specs=pl.BlockSpec((tm, N), lambda i: (i, 0)),
        compiler_params=_cparams(("parallel",)),
    )(x2d, g.reshape(1, C), b.reshape(1, C), w, bias.reshape(1, N))


def _linear_residual_kernel(y_ref, w_ref, b_ref, res_ref, o_ref):
    acc = jnp.dot(y_ref[...], w_ref[...], preferred_element_type=jnp.float32)
    acc = acc + b_ref[...] + res_ref[...].astype(jnp.float32)
    o_ref[...] = acc.astype(o_ref.dtype)


def linear_residual(y2d, w, b, res2d, *, tm_pref=None):
    # out = res + y @ w + b   (residual add fused into the projection epilogue)
    M, K = y2d.shape
    N = w.shape[1]
    tm = _row_tile(M, tm_pref or _TM_MM)
    return pl.pallas_call(
        _linear_residual_kernel,
        out_shape=jax.ShapeDtypeStruct((M, N), res2d.dtype),
        grid=(M // tm,),
        in_specs=[pl.BlockSpec((tm, K), lambda i: (i, 0)),
                  pl.BlockSpec((K, N), lambda i: (0, 0)),
                  pl.BlockSpec((1, N), lambda i: (0, 0)),
                  pl.BlockSpec((tm, N), lambda i: (i, 0))],
        out_specs=pl.BlockSpec((tm, N), lambda i: (i, 0)),
        compiler_params=_cparams(("parallel",)),
    )(y2d, w, b.reshape(1, N), res2d)


def _ln_mlp_residual_kernel(x_ref, g_ref, b_ref, w1_ref, b1_ref,
                            w2_ref, b2_ref, o_ref):
    # ln2 -> fc -> GELU(tanh) -> proj -> +residual, fully fused for one M tile.
    x = x_ref[...].astype(jnp.float32)
    mean = jnp.mean(x, axis=-1, keepdims=True)
    var = jnp.mean(jnp.square(x - mean), axis=-1, keepdims=True)
    xn = (x - mean) * jax.lax.rsqrt(var + 1e-5)
    xn = (xn * g_ref[...] + b_ref[...]).astype(w1_ref.dtype)
    h = jnp.dot(xn, w1_ref[...], preferred_element_type=jnp.float32) + b1_ref[...]
    c = math.sqrt(2.0 / math.pi)
    h = 0.5 * h * (1.0 + jnp.tanh(c * (h + 0.044715 * h * h * h)))
    o = jnp.dot(h.astype(w2_ref.dtype), w2_ref[...],
                preferred_element_type=jnp.float32) + b2_ref[...]
    o_ref[...] = (o + x).astype(o_ref.dtype)


def ln_mlp_residual(x2d, g, b, w1, b1, w2, b2, *, tm_pref=None):
    # VMEM budget @ C=768: w1+w2 double-buffered ~18.9 MiB (bf16) + f32 hidden
    # tile (tm, 4C).  tm=256 keeps this ~23 MiB (v7x, 32 MiB scoped); tm=512 is
    # used only on v5e/v6e where the limit is raised to 64 MiB.
    M, C = x2d.shape
    F4 = w1.shape[1]
    tm = _row_tile(M, tm_pref or _TM_MM)
    return pl.pallas_call(
        _ln_mlp_residual_kernel,
        out_shape=jax.ShapeDtypeStruct((M, C), x2d.dtype),
        grid=(M // tm,),
        in_specs=[pl.BlockSpec((tm, C), lambda i: (i, 0)),
                  pl.BlockSpec((1, C), lambda i: (0, 0)),
                  pl.BlockSpec((1, C), lambda i: (0, 0)),
                  pl.BlockSpec((C, F4), lambda i: (0, 0)),
                  pl.BlockSpec((1, F4), lambda i: (0, 0)),
                  pl.BlockSpec((F4, C), lambda i: (0, 0)),
                  pl.BlockSpec((1, C), lambda i: (0, 0))],
        out_specs=pl.BlockSpec((tm, C), lambda i: (i, 0)),
        compiler_params=_cparams(("parallel",)),
    )(x2d, g.reshape(1, C), b.reshape(1, C), w1, b1.reshape(1, F4),
      w2, b2.reshape(1, C))


def _channel_add_kernel(base_ref, s_ref, w_ref, b_ref, scale_ref, o_ref):
    acc = jnp.dot(s_ref[...], w_ref[...], preferred_element_type=jnp.float32)
    acc = (acc + b_ref[...]) * scale_ref[0, 0]
    o_ref[...] = (base_ref[...].astype(jnp.float32) + acc).astype(o_ref.dtype)


def channel_add(base2d, small2d, w, b, scale, *, tm_pref=None):
    # base + channel_scale * (small @ w + b), fused.
    M, C = base2d.shape
    K = small2d.shape[1]
    tm = _row_tile(M, tm_pref or _TM_MM)
    return pl.pallas_call(
        _channel_add_kernel,
        out_shape=jax.ShapeDtypeStruct((M, C), base2d.dtype),
        grid=(M // tm,),
        in_specs=[pl.BlockSpec((tm, C), lambda i: (i, 0)),
                  pl.BlockSpec((tm, K), lambda i: (i, 0)),
                  pl.BlockSpec((K, C), lambda i: (0, 0)),
                  pl.BlockSpec((1, C), lambda i: (0, 0)),
                  pl.BlockSpec((1, 1), lambda i: (0, 0))],
        out_specs=pl.BlockSpec((tm, C), lambda i: (i, 0)),
        compiler_params=_cparams(("parallel",)),
    )(base2d, small2d, w, b.reshape(1, C), scale.reshape(1, 1))


def _flash_attn_kernel(q_ref, k_ref, v_ref, o_ref, q_sc, m_sc, l_sc, acc_sc,
                       *, scale, tq, tk):
    qi = pl.program_id(1)
    ki = pl.program_id(2)
    nk = pl.num_programs(2)
    q_start = qi * tq
    k_start = ki * tk

    @pl.when(ki == 0)
    def _():
        m_sc[...] = jnp.full_like(m_sc, -1e30)
        l_sc[...] = jnp.zeros_like(l_sc)
        acc_sc[...] = jnp.zeros_like(acc_sc)
        # Hoisted q transpose + 1/sqrt(Dh) scale: done once per (b, q tile) and
        # reused for every kv step (frees XLU/VALU slots in the inner loop).
        q = jnp.transpose(q_ref[0, :, 0], (1, 0, 2)).astype(jnp.float32)
        q_sc[...] = (q * scale).astype(q_sc.dtype)

    def _attend(apply_mask):
        k = jnp.transpose(k_ref[0, :, 0], (1, 0, 2))        # (H, tk, Dh) bf16
        v = jnp.transpose(v_ref[0, :, 0], (1, 0, 2))        # (H, tk, Dh) bf16
        s = jnp.einsum('hqd,hkd->hqk', q_sc[...], k,
                       preferred_element_type=jnp.float32)  # (H, tq, tk) f32
        if apply_mask:
            row = q_start + jax.lax.broadcasted_iota(jnp.int32, (tq, tk), 0)
            col = k_start + jax.lax.broadcasted_iota(jnp.int32, (tq, tk), 1)
            s = jnp.where((row >= col)[None], s, -1e30)      # causal mask (f32)
        m_prev = m_sc[...]                                   # (H, tq, 1)
        m_new = jnp.maximum(m_prev, jnp.max(s, axis=-1, keepdims=True))
        alpha = jnp.exp(m_prev - m_new)
        p = jnp.exp(s - m_new)
        l_sc[...] = alpha * l_sc[...] + jnp.sum(p, axis=-1, keepdims=True)
        pv = jnp.einsum('hqk,hkd->hqd', p.astype(v.dtype), v,
                        preferred_element_type=jnp.float32)
        acc_sc[...] = alpha * acc_sc[...] + pv
        m_sc[...] = m_new

    # Diagonal-straddling kv blocks: need the iota/compare/select causal mask.
    @pl.when(jnp.logical_and(k_start <= q_start + (tq - 1),
                             k_start + (tk - 1) > q_start))
    def _():
        _attend(True)

    # Interior (fully-unmasked) kv blocks: skip the mask entirely.
    @pl.when(k_start + (tk - 1) <= q_start)
    def _():
        _attend(False)

    # Fully-masked blocks (k_start > q_start + tq - 1) fall through: no compute,
    # and their k/v index_map is clamped so no DMA either.

    @pl.when(ki == nk - 1)
    def _():
        out = acc_sc[...] * pl.reciprocal(l_sc[...], approx=True)  # (H, tq, Dh)
        # lane-dense (tq, C) store instead of a Dh=64-wide partial store.
        o_ref[0] = (jnp.transpose(out, (1, 0, 2))
                    .reshape(tq, -1).astype(o_ref.dtype))


def flash_attention(qkv, B, T, H, Dh, *, t_pref=None):
    """qkv: (B*T, 3*C) slab from the fused ln1->c_attn kernel.

    Reads q/k/v straight from the (B, T, 3, H, Dh) view (no XLA transposes)
    and writes a lane-dense (B, T, C) output that reshapes for free to (M, C)."""
    C = H * Dh
    qkv5 = qkv.reshape(B, T, 3, H, Dh)                 # free view
    t = _row_tile(T, t_pref or _T_ATTN)
    tq = tk = t
    nq, nk = T // tq, T // tk

    def last_kv(qi):                                   # last kv block on/below diag
        return (qi * tq + tq - 1) // tk

    kernel = functools.partial(_flash_attn_kernel,
                               scale=1.0 / math.sqrt(Dh), tq=tq, tk=tk)
    y = pl.pallas_call(
        kernel,
        out_shape=jax.ShapeDtypeStruct((B, T, C), qkv.dtype),
        grid=(B, nq, nk),
        in_specs=[
            pl.BlockSpec((1, tq, 1, H, Dh), lambda b, qi, ki: (b, qi, 0, 0, 0)),
            # Clamp to the causal boundary: fully-masked upper-triangular kv
            # blocks repeat the previous block index -> their HBM DMA is skipped.
            pl.BlockSpec((1, tk, 1, H, Dh),
                         lambda b, qi, ki: (b, jnp.minimum(ki, last_kv(qi)),
                                            1, 0, 0)),
            pl.BlockSpec((1, tk, 1, H, Dh),
                         lambda b, qi, ki: (b, jnp.minimum(ki, last_kv(qi)),
                                            2, 0, 0)),
        ],
        out_specs=pl.BlockSpec((1, tq, C), lambda b, qi, ki: (b, qi, 0)),
        scratch_shapes=[pltpu.VMEM((H, tq, Dh), qkv.dtype),   # scaled q (bf16)
                        pltpu.VMEM((H, tq, 1), jnp.float32),  # m
                        pltpu.VMEM((H, tq, 1), jnp.float32),  # l
                        pltpu.VMEM((H, tq, Dh), jnp.float32)],  # acc
        compiler_params=_cparams(("parallel", "parallel", "arbitrary")),
    )(qkv5, qkv5, qkv5)
    return y.reshape(B * T, C)                          # free view


def _ln_lm_head_kernel(x_ref, g_ref, b_ref, wte_ref, o_ref):
    # ln_f fused into the lm_head prologue; logits = ln(x) @ wte^T without
    # materializing the transpose (contract on C).
    x = x_ref[...].astype(jnp.float32)
    mean = jnp.mean(x, axis=-1, keepdims=True)
    var = jnp.mean(jnp.square(x - mean), axis=-1, keepdims=True)
    xn = (x - mean) * jax.lax.rsqrt(var + 1e-5)
    xn = (xn * g_ref[...] + b_ref[...]).astype(wte_ref.dtype)
    o_ref[...] = jax.lax.dot_general(
        xn, wte_ref[...], (((1,), (1,)), ((), ())),
        preferred_element_type=jnp.float32).astype(o_ref.dtype)


def ln_lm_head(x2d, g, b, wte, *, tm_pref=None, tv_pref=None,
               out_dtype=jnp.float32):
    M, C = x2d.shape
    V = wte.shape[0]
    tm = _row_tile(M, tm_pref or _TM_MM)
    tv = _row_tile(V, tv_pref or _TV_HEAD)
    return pl.pallas_call(
        _ln_lm_head_kernel,
        out_shape=jax.ShapeDtypeStruct((M, V), out_dtype),
        # vocab tile slow / m tile fast: the wte block index is constant across
        # consecutive steps so each weight tile is DMA'd once; a large tv cuts
        # the redundant x re-reads.
        grid=(V // tv, M // tm),
        in_specs=[pl.BlockSpec((tm, C), lambda j, i: (i, 0)),
                  pl.BlockSpec((1, C), lambda j, i: (0, 0)),
                  pl.BlockSpec((1, C), lambda j, i: (0, 0)),
                  pl.BlockSpec((tv, C), lambda j, i: (j, 0))],
        out_specs=pl.BlockSpec((tm, tv), lambda j, i: (i, j)),
        compiler_params=_cparams(("parallel", "parallel")),
    )(x2d, g.reshape(1, C), b.reshape(1, C), wte)


# ----------------------------- Model glue ----------------------------------


def init_params(key, cfg):
    n_embd = cfg["n_embd"]
    n_layer = cfg["n_layer"]
    vocab = cfg["vocab_size"]
    channel_dim = 32
    std = 0.02
    resid_std = 0.02 * (2 * n_layer) ** -0.5

    keys = iter(jax.random.split(key, 64))

    def normal(shape, s):
        # bf16 weight storage: halves HBM/DMA bytes and feeds the MXU's bf16 path.
        return (s * jax.random.normal(next(keys), shape)).astype(jnp.bfloat16)

    params = {
        # embeddings (wte tied with lm_head)
        "wte": normal((vocab, n_embd), std),
        "wpe": normal((cfg["block_size"], n_embd), std),
        "wce": normal((cfg["num_channels"], channel_dim), std),
        # channel projection (weights stored as (in, out))
        "channel_proj_w": normal((channel_dim, n_embd), std),
        "channel_proj_b": jnp.zeros((n_embd,), jnp.float32),
        "channel_scale": jnp.ones((1, 1), jnp.float32),
        "ln_f_w": jnp.ones((n_embd,), jnp.float32),
        "ln_f_b": jnp.zeros((n_embd,), jnp.float32),
        "blocks": [],
    }
    for _ in range(n_layer):
        blk = {
            "ln1_w": jnp.ones((n_embd,), jnp.float32),
            "ln1_b": jnp.zeros((n_embd,), jnp.float32),
            "attn_w": normal((n_embd, 3 * n_embd), std),
            "attn_b": jnp.zeros((3 * n_embd,), jnp.float32),
            "proj_w": normal((n_embd, n_embd), resid_std),      # NANOGPT_SCALE_INIT
            "proj_b": jnp.zeros((n_embd,), jnp.float32),
            "ln2_w": jnp.ones((n_embd,), jnp.float32),
            "ln2_b": jnp.zeros((n_embd,), jnp.float32),
            "fc_w": normal((n_embd, 4 * n_embd), std),
            "fc_b": jnp.zeros((4 * n_embd,), jnp.float32),
            "proj2_w": normal((4 * n_embd, n_embd), resid_std),  # NANOGPT_SCALE_INIT
            "proj2_b": jnp.zeros((n_embd,), jnp.float32),
        }
        params["blocks"].append(blk)
    return params


def block_forward(p, x2d, B, T, C, H, Dh):
    # ---- attention branch: fused ln1->qkv, flash attention, fused proj+residual
    qkv = ln_linear(x2d, p["ln1_w"], p["ln1_b"], p["attn_w"], p["attn_b"])
    y = flash_attention(qkv, B, T, H, Dh)                       # (M, C) lane-dense
    x2d = linear_residual(y, p["proj_w"], p["proj_b"], x2d)     # dropout = identity (eval)
    # ---- MLP branch: fused ln2 -> fc -> GELU -> proj -> +residual
    x2d = ln_mlp_residual(x2d, p["ln2_w"], p["ln2_b"],
                          p["fc_w"], p["fc_b"], p["proj2_w"], p["proj2_b"])
    return x2d


def gpt_forward(params, cfg, idx, channel_idx=None):
    B, T = idx.shape
    C = cfg["n_embd"]
    H = cfg["n_head"]
    Dh = C // H
    M = B * T

    # Embedding gathers stay in XLA glue (data-dependent gather).
    tok_emb = params["wte"][idx]                                # (B, T, C) bf16
    pos_emb = params["wpe"][:T]                                 # (T, C)
    x = (tok_emb + pos_emb[None, :, :]).reshape(M, C)

    if channel_idx is not None:
        cha_small = params["wce"][channel_idx].reshape(M, -1)   # (M, 32)
        x = channel_add(x, cha_small, params["channel_proj_w"],
                        params["channel_proj_b"], params["channel_scale"])

    for blk in params["blocks"]:
        x = block_forward(blk, x, B, T, C, H, Dh)

    # ln_f is fused into the lm_head prologue (no standalone (M, C) round trip);
    # lm_head weight tied to wte, contraction on C inside the kernel (no wte.T).
    logits = ln_lm_head(x, params["ln_f_w"], params["ln_f_b"], params["wte"],
                        out_dtype=_LOGITS_DTYPE)                # (M, vocab)
    return logits.reshape(B, T, cfg["vocab_size"])


# ----------------------------- Main ----------------------------------------

if __name__ == "__main__":
    cfg = dict(vocab_size=64, block_size=16, n_layer=2, n_head=2,
               n_embd=32, num_channels=4)

    key = jax.random.PRNGKey(0)
    pkey, ikey, ckey = jax.random.split(key, 3)
    params = init_params(pkey, cfg)

    B, T = 2, 8
    idx = jax.random.randint(ikey, (B, T), 0, cfg["vocab_size"], dtype=jnp.int32)
    channel_idx = jax.random.randint(ckey, (B, T), 0, cfg["num_channels"],
                                     dtype=jnp.int32)

    logits = gpt_forward(params, cfg, idx, channel_idx)
    logits = jax.block_until_ready(logits)

    assert logits.shape == (B, T, cfg["vocab_size"])
    assert bool(jnp.all(jnp.isfinite(logits)))
    print("KERNEL_OK")
</pallas_src>

<mosaic_0001>
module attributes {stable_mosaic.version = 11 : i64} {
  func.func @_channel_add_kernel(%arg0: i32, %arg1: memref<16x32xbf16, #tpu.memory_space<vmem>>, %arg2: memref<16x32xbf16, #tpu.memory_space<vmem>>, %arg3: memref<32x32xbf16, #tpu.memory_space<vmem>>, %arg4: memref<1x32xf32, #tpu.memory_space<vmem>>, %arg5: memref<1x1xf32, #tpu.memory_space<vmem>>, %arg6: memref<16x32xbf16, #tpu.memory_space<vmem>>) attributes {dimension_semantics = [#tpu.dimension_semantics<parallel>], iteration_bounds = array<i64: 1>, scalar_prefetch = 0 : i64, scratch_operands = 0 : i64, tpu.core_type = #tpu.core_type<tc>, window_params = [{transform_indices = @transform_0, window_bounds = array<i64: 16, 32>}, {transform_indices = @transform_1, window_bounds = array<i64: 16, 32>}, {pipeline_mode = #tpu.pipeline_mode<synchronous>, transform_indices = @transform_2, window_bounds = array<i64: 32, 32>}, {pipeline_mode = #tpu.pipeline_mode<synchronous>, transform_indices = @transform_3, window_bounds = array<i64: 1, 32>}, {pipeline_mode = #tpu.pipeline_mode<synchronous>, transform_indices = @transform_4, window_bounds = array<i64: 1, 1>}, {transform_indices = @transform_5, window_bounds = array<i64: 16, 32>}]} {
    %c0 = arith.constant 0 : index
    %c0_0 = arith.constant 0 : index
    %0 = vector.load %arg2[%c0, %c0_0] : memref<16x32xbf16, #tpu.memory_space<vmem>>, vector<16x32xbf16>
    %c0_1 = arith.constant 0 : index
    %c0_2 = arith.constant 0 : index
    %1 = vector.load %arg3[%c0_1, %c0_2] : memref<32x32xbf16, #tpu.memory_space<vmem>>, vector<32x32xbf16>
    %cst = arith.constant dense<0.000000e+00> : vector<16x32xf32>
    %2 = tpu.matmul %0, %1, %cst {dimension_numbers = #tpu.dot_dimension_numbers<[1], [0], [0], [1], [0, 0, 1, 1], [], []>} : vector<16x32xbf16>, vector<32x32xbf16>, vector<16x32xf32> -> vector<16x32xf32>
    %c0_3 = arith.constant 0 : index
    %c0_4 = arith.constant 0 : index
    %3 = vector.load %arg4[%c0_3, %c0_4] : memref<1x32xf32, #tpu.memory_space<vmem>>, vector<1x32xf32>
    %4 = vector.broadcast %3 : vector<1x32xf32> to vector<16x32xf32>
    %5 = arith.addf %2, %4 : vector<16x32xf32>
    %c0_5 = arith.constant 0 : index
    %c0_6 = arith.constant 0 : index
    %6 = vector.load %arg5[%c0_5, %c0_6] : memref<1x1xf32, #tpu.memory_space<vmem>>, vector<1x1xf32>
    %7 = vector.extract %6[0, 0] : f32 from vector<1x1xf32>
    %8 = vector.broadcast %7 : f32 to vector<16x32xf32>
    %9 = arith.mulf %5, %8 : vector<16x32xf32>
    %c0_7 = arith.constant 0 : index
    %c0_8 = arith.constant 0 : index
    %10 = vector.load %arg1[%c0_7, %c0_8] : memref<16x32xbf16, #tpu.memory_space<vmem>>, vector<16x32xbf16>
    %11 = arith.extf %10 : vector<16x32xbf16> to vector<16x32xf32>
    %12 = arith.addf %11, %9 : vector<16x32xf32>
    %13 = arith.truncf %12 : vector<16x32xf32> to vector<16x32xbf16>
    %c0_9 = arith.constant 0 : index
    %c0_10 = arith.constant 0 : index
    %14 = vector.load %arg6[%c0_9, %c0_10] : memref<16x32xbf16, #tpu.memory_space<vmem>>, vector<16x32xbf16>
    tpu.vector_store %arg6[%c0_9, %c0_10], %13 {strides = array<i32>} : memref<16x32xbf16, #tpu.memory_space<vmem>>, vector<16x32xbf16>,
    return
  }
  func.func @transform_0(%arg0: i32) -> (i32, i32) {
    %c0_i32 = arith.constant 0 : i32
    %c0_i32_0 = arith.constant 0 : i32
    return %arg0, %c0_i32 : i32, i32
  }
  func.func @transform_1(%arg0: i32) -> (i32, i32) {
    %c0_i32 = arith.constant 0 : i32
    %c0_i32_0 = arith.constant 0 : i32
    return %arg0, %c0_i32 : i32, i32
  }
  func.func @transform_2(%arg0: i32) -> (i32, i32) {
    %c0_i32 = arith.constant 0 : i32
    %c0_i32_0 = arith.constant 0 : i32
    %c0_i32_1 = arith.constant 0 : i32
    return %c0_i32, %c0_i32_0 : i32, i32
  }
  func.func @transform_3(%arg0: i32) -> (i32, i32) {
    %c0_i32 = arith.constant 0 : i32
    %c0_i32_0 = arith.constant 0 : i32
    %c0_i32_1 = arith.constant 0 : i32
    return %c0_i32, %c0_i32_0 : i32, i32
  }
  func.func @transform_4(%arg0: i32) -> (i32, i32) {
    %c0_i32 = arith.constant 0 : i32
    %c0_i32_0 = arith.constant 0 : i32
    %c0_i32_1 = arith.constant 0 : i32
    return %c0_i32, %c0_i32_0 : i32, i32
  }
  func.func @transform_5(%arg0: i32) -> (i32, i32) {
    %c0_i32 = arith.constant 0 : i32
    %c0_i32_0 = arith.constant 0 : i32
    return %arg0, %c0_i32 : i32, i32
  }
}

</mosaic_0001>

<llo_original>
// kernel: tpu_custom_call.1
$region0: #{tpu_custom_call.1}
  #allocation0 [shape = 'u32[]', space=smem, size = 0x4, offset = 0x4, fixed_abs, tag = 'smem constant byte address 0x4 - core index']
  #allocation1 [shape = 'u32[144,128]{1,0:T(1,128)}', space=vmem, size = 0x12000, scoped, tag = 'internal scratch']
  #allocation2 [shape = 'f32[1,1]{1,0:T(1,128)S(1)}', space=vmem, size = 0x200, scoped, tag = 'scoped memory for tpu_custom_call.1']
  %s0 = inlined_call_operand.hbm [shape: bf16[16,32], index: 0, kind: input, shape index: {}]
  %s1 = inlined_call_operand.hbm [shape: bf16[16,32], index: 1, kind: input, shape index: {}]
  %s2 = inlined_call_operand.hbm [shape: bf16[32,32], index: 2, kind: input, shape index: {}]
  %s3 = inlined_call_operand.vmem [shape: f32[1,32], index: 3, kind: input, shape index: {}]
  %s4 = inlined_call_operand.<no memory space> [shape: f32[1,1], index: 4, kind: input, shape index: {}]
  %s5 = inlined_call_operand.hbm [shape: bf16[16,32], index: 5, kind: output, shape index: {}]
  %s6 = sld [smem:[#allocation0]]
  $region42: #{tpu_custom_call.1} parent=0
    _
  %s8 = ssub.s32 1, %s6
  %s9 = scalar_select 0, %s8, %s6
  %v10 = vstv %s4
  %11 = vst [vmem:[#allocation2] sm:$0x1] %v10
  $region1: #{tpu_custom_call.1} parent=0
    #allocation3 [shape = 'u8[4096]{0}', space=vmem, size = 0x1000, scoped, tag = 'input window, operand 0, single buffered']
    #allocation4 [shape = 's32[1]{0}', space=sflag, size = 0x4, scoped, tag = 'scoped memory for tpu_custom_call.1']
    #allocation5 [shape = 's32[1]{0}', space=sflag, size = 0x4, scoped, tag = 'scoped memory for tpu_custom_call.1']
    #allocation6 [shape = 'u8[4096]{0}', space=vmem, size = 0x1000, scoped, tag = 'input window, operand 1, single buffered']
    #allocation7 [shape = 's32[1]{0}', space=sflag, size = 0x4, scoped, tag = 'scoped memory for tpu_custom_call.1']
    #allocation8 [shape = 'u8[8192]{0}', space=vmem, size = 0x2000, scoped, tag = 'input window, operand 2, single buffered']
    #allocation9 [shape = 'u8[4096]{0}', space=vmem, size = 0x1000, scoped, tag = 'output window, operand 0, single buffered']
    %12 = vsyncpa [#allocation4], 0
    %13 = vsyncpa [#allocation7], 0
    %14 = vsyncpa [#allocation5], 0
    // Predicated region
    $region2: #{tpu_custom_call.1} parent=1 // pred_check
      _
    $region3: #{tpu_custom_call.1} parent=1 // pred_check_branch
      %16 = sbr.rel (0) target = $region5
    $region4: #{tpu_custom_call.1} parent=1 // pred_region
      %s18 = ssub.s32 128, 128
      %19 = vsyncadd [#allocation4], %s18
      %s20 = sshll.u32 [#allocation3], 4
      %s21 = int_to_ptr.vmem [resolvable:$true] %s20
      %26 = dma.hbm_to_vmem [thread:$0]  %s0, 128, %s21, [#allocation4], 64, 64, 4
    $region5: #{tpu_custom_call.1} parent=1 // pred_fallthru
      _
    // Predicated region
    $region6: #{tpu_custom_call.1} parent=1 // pred_check
      _
    $region7: #{tpu_custom_call.1} parent=1 // pred_check_branch
      %28 = sbr.rel (0) target = $region9
    $region8: #{tpu_custom_call.1} parent=1 // pred_region
      %s30 = ssub.s32 128, 128
      %31 = vsyncadd [#allocation7], %s30
      %s32 = sshll.u32 [#allocation6], 4
      %s33 = int_to_ptr.vmem [resolvable:$true] %s32
      %38 = dma.hbm_to_vmem [thread:$0]  %s1, 128, %s33, [#allocation7], 64, 64, 4
    $region9: #{tpu_custom_call.1} parent=1 // pred_fallthru
      _
    // Predicated region
    $region10: #{tpu_custom_call.1} parent=1 // pred_check
      _
    $region11: #{tpu_custom_call.1} parent=1 // pred_check_branch
      %40 = sbr.rel (0) target = $region13
    $region12: #{tpu_custom_call.1} parent=1 // pred_region
      %s42 = ssub.s32 256, 256
      %43 = vsyncadd [#allocation7], %s42
      %s44 = sshll.u32 [#allocation8], 4
      %s45 = int_to_ptr.vmem [resolvable:$true] %s44
      %50 = dma.hbm_to_vmem [thread:$0]  %s2, 256, %s45, [#allocation7], 64, 64, 4
    $region13: #{tpu_custom_call.1} parent=1 // pred_fallthru
      _
    // Predicated region
    $region14: #{tpu_custom_call.1} parent=1 // pred_check
      _
    $region15: #{tpu_custom_call.1} parent=1 // pred_check_branch
      %52 = sbr.rel (0) target = $region17
    $region16: #{tpu_custom_call.1} parent=1 // pred_region
      _
    $region17: #{tpu_custom_call.1} parent=1 // pred_fallthru
      _
    // Predicated region
    $region18: #{tpu_custom_call.1} parent=1 // pred_check
      _
    $region19: #{tpu_custom_call.1} parent=1 // pred_check_branch
      %54 = sbr.rel (0) target = $region21
    $region20: #{tpu_custom_call.1} parent=1 // pred_region
      _
    $region21: #{tpu_custom_call.1} parent=1 // pred_fallthru
      _
    // Predicated region
    $region22: #{tpu_custom_call.1} parent=1 // pred_check
      _
    $region23: #{tpu_custom_call.1} parent=1 // pred_check_branch
      %56 = sbr.rel (0) target = $region25
    $region24: #{tpu_custom_call.1} parent=1 // pred_region
      %57 = dma.done [#allocation4], 128
    $region25: #{tpu_custom_call.1} parent=1 // pred_fallthru
      _
    // Predicated region
    $region26: #{tpu_custom_call.1} parent=1 // pred_check
      _
    $region27: #{tpu_custom_call.1} parent=1 // pred_check_branch
      %59 = sbr.rel (0) target = $region29
    $region28: #{tpu_custom_call.1} parent=1 // pred_region
      %60 = dma.done [#allocation7], 128
    $region29: #{tpu_custom_call.1} parent=1 // pred_fallthru
      _
    // Predicated region
    $region30: #{tpu_custom_call.1} parent=1 // pred_check
      _
    $region31: #{tpu_custom_call.1} parent=1 // pred_check_branch
      %62 = sbr.rel (0) target = $region33
    $region32: #{tpu_custom_call.1} parent=1 // pred_region
      %63 = dma.done [#allocation7], 256
    $region33: #{tpu_custom_call.1} parent=1 // pred_fallthru
      _
    %v65 = vld [vmem:[#allocation6] sm:$0xf]
    %v66 = vld [vmem:[#allocation6 + $0x4] sm:$0xf]
    %v67 = vld [vmem:[#allocation8] sm:$0xf]
    %v68 = vld [vmem:[#allocation8 + $0x4] sm:$0xf]
    %v69 = vld [vmem:[#allocation8 + $0x8] sm:$0xf]
    %v70 = vld [vmem:[#allocation8 + $0xc] sm:$0xf]
    %v71 = vld [vmem:[%s3] sm:$0x1]
    %v73 = vlaneseq
    %v74 = vshrl.u32 %v73, 7
    %v75 = vsub.s32 0, %v74
    %v76 = vrot.slane %v71, %v75
    %v80 = vunpack.c.l.b16 %v65
    %v81 = vunpack.c.l.b16 %v66
    %v82 = vpack.c.b16 %v81, %v80
    %v87 = vunpack.c.l.b16 %v67
    %v88 = vunpack.c.l.b16 %v68
    %v89 = vunpack.c.l.b16 %v69
    %v90 = vunpack.c.l.b16 %v70
    %v91 = vpack.c.b16 %v88, %v87
    %v92 = vpack.c.b16 %v90, %v89
    %vm95 = vcmask 261120
    %v97 = vsel %vm95, %v82, 0
    %99 = vmatprep.subr.bf16.mxu0 0
    %100 = vmatpush1.bf16.msra.mxu0 %v91
    %101 = vmatprep.subr.bf16.mxu0 0
    %102 = vmatpush1.bf16.msra.mxu0 %v92
    %103 = vmatprep.subr.bf16.mxu0 0
    %104 = vmatpush1.bf16.msra.mxu0 0
    %105 = vmatprep.subr.bf16.mxu0 0
    %106 = vmatpush1.bf16.msra.mxu0 0
    %107 = vmatprep.subr.bf16.mxu0 0
    %108 = vmatpush1.bf16.msra.mxu0 0
    %109 = vmatprep.subr.bf16.mxu0 0
    %110 = vmatpush1.bf16.msra.mxu0 0
    %111 = vmatprep.subr.bf16.mxu0 0
    %112 = vmatpush1.bf16.msra.mxu0 0
    %113 = vmatprep.subr.bf16.mxu0 0
    %114 = vmatpush1.bf16.msra.mxu0 0
    %115 = vmatprep.subr.bf16.mxu0 0
    %116 = vmatpush1.bf16.msra.mxu0 0
    %117 = vmatprep.subr.bf16.mxu0 0
    %118 = vmatpush1.bf16.msra.mxu0 0
    %119 = vmatprep.subr.bf16.mxu0 0
    %120 = vmatpush1.bf16.msra.mxu0 0
    %121 = vmatprep.subr.bf16.mxu0 0
    %122 = vmatpush1.bf16.msra.mxu0 0
    %123 = vmatprep.subr.bf16.mxu0 0
    %124 = vmatpush1.bf16.msra.mxu0 0
    %125 = vmatprep.subr.bf16.mxu0 0
    %126 = vmatpush1.bf16.msra.mxu0 0
    %127 = vmatprep.subr.bf16.mxu0 0
    %128 = vmatpush1.bf16.msra.mxu0 0
    %129 = vmatprep.subr.bf16.mxu0 0
    %130 = vmatpush1.bf16.msra.mxu0 0
    %131 = vmatprep.mubr.bf16.mxu0 0
    %132 = vmatmul.mubr.bf16.gmra.mrb[0].mxu0 %v97
    %v133 = vpop.f32.mrb[0].mxu0
    %v134 = vadd.f32 %v76, %v133
    %v135 = vpop.f32.mrb[0].mxu0
    %v136 = vpop.f32.mrb[0].mxu0
    %v137 = vadd.f32 %v76, %v136
    %v138 = vpop.f32.mrb[0].mxu0
    %139 = vdwg.mxu0
    %v140 = vld [vmem:[#allocation2] sm:$0x1]
    %s141 = vtos %v140
    %v142 = vstv %s141
    %v143 = vmul.f32 %v134, %v142
    %v144 = vmul.f32 %v137, %v142
    %v145 = vld [vmem:[#allocation3] sm:$0xf]
    %v146 = vld [vmem:[#allocation3 + $0x4] sm:$0xf]
    %v147 = vunpack.c.l.bf16 %v145
    %v148 = vunpack.c.l.bf16 %v146
    %v149 = vadd.f32 %v147, %v143
    %v150 = vadd.f32 %v148, %v144
    %v151 = vpack.c.bf16 %v150, %v149
    %v153 = vunpack.c.l.b16 %v151
    %v154 = vunpack.c.h.b16 %v151
    %v155 = vpack.c.b16 %v153, %v153
    %v156 = vpack.c.b16 %v154, %v154
    %vm159 = vcmask 257024
    %160 = vst.msk [vmem:[#allocation9] sm:$0xf] %vm159, %v155
    %161 = vst.msk [vmem:[#allocation9 + $0x4] sm:$0xf] %vm159, %v156
    // Predicated region
    $region34: #{tpu_custom_call.1} parent=1 // pred_check
      _
    $region35: #{tpu_custom_call.1} parent=1 // pred_check_branch
      %163 = sbr.rel (0) target = $region37
    $region36: #{tpu_custom_call.1} parent=1 // pred_region
      %s165 = ssub.s32 128, 128
      %166 = vsyncadd [#allocation5], %s165
      %s167 = sshll.u32 [#allocation9], 4
      %s168 = int_to_ptr.vmem [resolvable:$true] %s167
      %173 = dma.vmem_to_hbm [thread:$0]  %s168, 128, %s5, [#allocation5], 64, 64, 4
    $region37: #{tpu_custom_call.1} parent=1 // pred_fallthru
      _
    // Predicated region
    $region38: #{tpu_custom_call.1} parent=1 // pred_check
      _
    $region39: #{tpu_custom_call.1} parent=1 // pred_check_branch
      %175 = sbr.rel (0) target = $region41
    $region40: #{tpu_custom_call.1} parent=1 // pred_region
      %176 = dma.done [#allocation5], 128
    $region41: #{tpu_custom_call.1} parent=1 // pred_fallthru
      _
    %177 = vsyncpa [#allocation4], 1
    %178 = vsyncpa [#allocation7], 1
    %179 = vsyncpa [#allocation5], 1

</llo_original>
